<compile_context>
chip_gen: v7x
topology: tpu7x:2x2x1
jax: 0.10.0
libtpu: 0.0.40
codegen_flags: <defaults>
</compile_context>

<pallas_src>
import functools
import math

import jax
import jax.numpy as jnp
from jax.experimental import pallas as pl
from jax.experimental.pallas import tpu as pltpu


# ----------------------------- hardware-aware budgets --------------------------

@functools.lru_cache(maxsize=None)
def _vmem_capacity_bytes():
    """Physical per-core VMEM; conservative (v7x-sized) default if query fails."""
    try:
        return int(pltpu.get_tpu_info().vmem_capacity_bytes)
    except Exception:
        return 64 << 20


def _budgets():
    """Per-block byte budget + scoped-VMEM cap, per TPU generation."""
    if _vmem_capacity_bytes() >= (100 << 20):          # v5e / v6e: 128 MiB phys
        return {"block": 6 << 20, "limit_cap": 56 << 20}
    return {"block": 3 << 20, "limit_cap": 40 << 20}   # v7x: 64 MiB phys


def _cparams(semantics, *block_bytes):
    """CompilerParams with an explicit scoped-VMEM limit derived from the actual
    block sizes (x2 for double buffering, + headroom).  Fixes v5e's 16 MiB
    default scoped limit without over-asking on v7x's 64 MiB physical VMEM."""
    need = 2 * int(sum(block_bytes)) + (2 << 20)
    limit = int(min(max(need, 16 << 20), _budgets()["limit_cap"]))
    return pltpu.CompilerParams(dimension_semantics=semantics,
                                vmem_limit_bytes=limit)


# ----------------------------- tiling helpers -----------------------------------

def _pick_tile(full, align, max_tile):
    """Largest t <= max_tile with t % align == 0 and full % t == 0.  Falls back
    to the full dimension (always a legal block size) when no aligned divisor
    exists — callers cap the resulting block bytes via vmem_limit_bytes."""
    if full <= max_tile:
        return full
    t = (max_tile // align) * align
    while t >= align:
        if full % t == 0:
            return t
        t -= align
    return full


# ----------------------------- fused squeeze + excite (primary path) ------------

def _fused_kernel(x_ref, w1_ref, b1_ref, w2_ref, b2_ref, o_ref, *, inv_hw):
    """One grid step handles bn whole images with x resident in VMEM:
    pool over HW, fc1 + ReLU, fc2 + h_sigmoid, channel re-scale, store."""
    x = x_ref[...].astype(jnp.float32)                               # (bn, C, HW)
    pooled = jnp.sum(x, axis=2) * inv_hw                             # (bn, C)
    h = jnp.dot(pooled, w1_ref[...],
                preferred_element_type=jnp.float32) + b1_ref[...]    # (bn, Cr)
    h = jnp.maximum(h, 0.0)                                          # ReLU
    z = jnp.dot(h, w2_ref[...],
                preferred_element_type=jnp.float32) + b2_ref[...]    # (bn, C)
    gate = jnp.clip(z + 3.0, 0.0, 6.0) * (1.0 / 6.0)                 # h_sigmoid
    o_ref[...] = (x * gate[:, :, None]).astype(o_ref.dtype)


def fused_forward(params, x_nchw):
    N, C, H, W = x_nchw.shape
    HW = H * W
    Cr = params["w1"].shape[1]
    x3 = x_nchw.reshape(N, C, HW)                  # free view of NCHW

    slab = C * HW * 4
    max_bn = max(1, _budgets()["block"] // slab)
    bn = _pick_tile(N, 1, max_bn)
    # Keep >= 2 grid steps when N >= 2 so both v7x TensorCores get work
    # (neutral on v5e/v6e).  At N == 1 a single step is unavoidable here.
    if N // bn < 2 and N >= 2:
        bn = _pick_tile(N, 1, max(1, bn // 2))

    block_bytes = bn * slab
    w_bytes = (C * Cr * 2 + Cr + C) * 4
    out = pl.pallas_call(
        functools.partial(_fused_kernel, inv_hw=1.0 / float(HW)),
        out_shape=jax.ShapeDtypeStruct((N, C, HW), x_nchw.dtype),
        grid=(N // bn,),
        in_specs=[
            pl.BlockSpec((bn, C, HW), lambda i: (i, 0, 0)),          # x slab
            pl.BlockSpec((C, Cr), lambda i: (0, 0)),                 # resident W1
            pl.BlockSpec((1, Cr), lambda i: (0, 0)),                 # b1
            pl.BlockSpec((Cr, C), lambda i: (0, 0)),                 # resident W2
            pl.BlockSpec((1, C), lambda i: (0, 0)),                  # b2
        ],
        out_specs=pl.BlockSpec((bn, C, HW), lambda i: (i, 0, 0)),
        compiler_params=_cparams(("parallel",),
                                 block_bytes, block_bytes, w_bytes),
    )(x3, params["w1"], params["b1"], params["w2"], params["b2"])
    return out.reshape(N, C, H, W)


# ----------------------------- fallback kernel 1: squeeze path ------------------

def _squeeze_kernel(x_ref, w1_ref, b1_ref, w2_ref, b2_ref, s_ref, acc_ref, *, inv_hw):
    """Grid (N, HW_tiles): accumulate per-channel sums over HW tiles; on the last
    tile run the two tiny FCs + h_sigmoid and emit this image's (1, C) gate.
    The per-step lane reduce is kept simple — this kernel streams x from HBM and
    the small XLU reduce sits under the DMA shadow."""
    j = pl.program_id(1)

    @pl.when(j == 0)
    def _():
        acc_ref[...] = jnp.zeros_like(acc_ref)

    acc_ref[...] += jnp.sum(x_ref[...].astype(jnp.float32), axis=2)   # (1, C)

    @pl.when(j == pl.num_programs(1) - 1)
    def _():
        pooled = acc_ref[...] * inv_hw                                # (1, C)
        h = jnp.dot(pooled, w1_ref[...],
                    preferred_element_type=jnp.float32) + b1_ref[...]
        h = jnp.maximum(h, 0.0)
        z = jnp.dot(h, w2_ref[...],
                    preferred_element_type=jnp.float32) + b2_ref[...]
        gate = jnp.clip(z + 3.0, 0.0, 6.0) * (1.0 / 6.0)
        s_ref[...] = gate.reshape(s_ref.shape)


def squeeze_gate(x_nchw, w1, b1, w2, b2, *, hw_tile_max=None):
    """Returns the (N, C) channel gate (fallback path for huge feature maps)."""
    N, C, H, W = x_nchw.shape
    HW = H * W
    Cr = w1.shape[1]
    x3 = x_nchw.reshape(N, C, HW)

    if hw_tile_max is None:
        # Bytes-based cap on the (1, C, hw_tile) block (C is taken whole, so cap
        # hw_tile accordingly) — review fix for wide MobileNet layers.
        hw_tile_max = max(128, (_budgets()["block"] // (4 * C)) // 128 * 128)
    hw_tile = _pick_tile(HW, 128, hw_tile_max)
    grid = (N, HW // hw_tile)

    x_block_bytes = C * hw_tile * 4
    w_bytes = (C * Cr * 2 + Cr + C) * 4

    s = pl.pallas_call(
        functools.partial(_squeeze_kernel, inv_hw=1.0 / float(HW)),
        out_shape=jax.ShapeDtypeStruct((N, 1, C), jnp.float32),
        grid=grid,
        in_specs=[
            pl.BlockSpec((1, C, hw_tile), lambda i, j: (i, 0, j)),
            pl.BlockSpec((C, Cr), lambda i, j: (0, 0)),   # resident weights
            pl.BlockSpec((1, Cr), lambda i, j: (0, 0)),
            pl.BlockSpec((Cr, C), lambda i, j: (0, 0)),
            pl.BlockSpec((1, C), lambda i, j: (0, 0)),
        ],
        out_specs=pl.BlockSpec((1, 1, C), lambda i, j: (i, 0, 0)),
        scratch_shapes=[pltpu.VMEM((1, C), jnp.float32)],
        compiler_params=_cparams(("parallel", "arbitrary"),
                                 x_block_bytes, w_bytes, C * 4),
    )(x3, w1, b1, w2, b2)
    return s.reshape(N, C)


# ----------------------------- fallback kernel 2: channel re-scale --------------

def _excite_kernel(x_ref, s_ref, o_ref):
    # (row_tile, hw_tile) * (row_tile, 1): broadcast along the lane (HW) axis,
    # lane-dense output store.
    o_ref[...] = (x_ref[...] * s_ref[...]).astype(o_ref.dtype)


def excite(x_nchw, s):
    """out[n, c, h, w] = x[n, c, h, w] * s[n, c]; x stays in NCHW layout."""
    N, C, H, W = x_nchw.shape
    HW = H * W
    M = N * C
    x2 = x_nchw.reshape(M, HW)
    s2 = s.reshape(M, 1).astype(jnp.float32)

    budget_elems = _budgets()["block"] // 4
    hw_tile = _pick_tile(HW, 128, max(128, (budget_elems // 8) // 128 * 128))
    row_tile = _pick_tile(M, 8, max(8, (budget_elems // hw_tile) // 8 * 8))

    # Guarantee >= 2 grid steps whenever a legal aligned split exists so both
    # v7x TensorCores get work (replaces the old "M % 16 == 0" hack).
    if (M // row_tile) * (HW // hw_tile) < 2:
        rt = _pick_tile(M, 8, max(8, row_tile // 2))
        if rt < row_tile:
            row_tile = rt
        else:
            ht = _pick_tile(HW, 128, max(128, hw_tile // 2))
            if ht < hw_tile:
                hw_tile = ht

    xb = row_tile * hw_tile * 4
    sb = row_tile * 128 * 4       # s block, lane-padded

    out = pl.pallas_call(
        _excite_kernel,
        out_shape=jax.ShapeDtypeStruct((M, HW), x_nchw.dtype),
        grid=(M // row_tile, HW // hw_tile),
        in_specs=[
            pl.BlockSpec((row_tile, hw_tile), lambda i, j: (i, j)),
            pl.BlockSpec((row_tile, 1), lambda i, j: (i, 0)),
        ],
        out_specs=pl.BlockSpec((row_tile, hw_tile), lambda i, j: (i, j)),
        compiler_params=_cparams(("parallel", "parallel"), xb, xb, sb),
    )(x2, s2)
    return out.reshape(N, C, H, W)


# ----------------------------- SqueezeBlock forward -----------------------------

def squeeze_block_forward(params, x, *, force_two_pass=False):
    """Exactly the PyTorch SqueezeBlock.forward: x * dense(avg_pool(x))."""
    N, C, H, W = x.shape
    HW = H * W
    if not force_two_pass and C * HW * 4 <= _budgets()["block"]:
        return fused_forward(params, x)          # x read once, written once
    # Huge-slab fallback: x streamed twice (pool kernel + re-scale kernel).
    s = squeeze_gate(x, params["w1"], params["b1"], params["w2"], params["b2"])
    return excite(x, s)


# ----------------------------- parameters & reference ---------------------------

def init_params(key, exp_size, divide=4):
    """nn.Linear-style init: U(-1/sqrt(fan_in), 1/sqrt(fan_in)) for W and b."""
    hid = exp_size // divide
    k1, k2, k3, k4 = jax.random.split(key, 4)
    b_in = 1.0 / math.sqrt(exp_size)
    b_hid = 1.0 / math.sqrt(hid)
    return {
        "w1": jax.random.uniform(k1, (exp_size, hid), jnp.float32, -b_in, b_in),
        "b1": jax.random.uniform(k2, (1, hid), jnp.float32, -b_in, b_in),
        "w2": jax.random.uniform(k3, (hid, exp_size), jnp.float32, -b_hid, b_hid),
        "b2": jax.random.uniform(k4, (1, exp_size), jnp.float32, -b_hid, b_hid),
    }


def reference_forward(params, x):
    N, C, H, W = x.shape
    pooled = jnp.mean(x, axis=(2, 3))                               # (N, C)
    h = jnp.maximum(pooled @ params["w1"] + params["b1"], 0.0)
    z = h @ params["w2"] + params["b2"]
    s = jnp.clip(z + 3.0, 0.0, 6.0) / 6.0
    return x * s.reshape(N, C, 1, 1)


# ----------------------------- main ----------------------------------------------

if __name__ == "__main__":
    key = jax.random.PRNGKey(0)
    pkey, xkey = jax.random.split(key)

    # SqueezeBlock(exp_size=64) on a (2, 64, 16, 16) NCHW feature map.
    N, C, H, W = 2, 64, 16, 16
    params = init_params(pkey, exp_size=C, divide=4)
    x = jax.random.normal(xkey, (N, C, H, W), jnp.float32)

    ref = reference_forward(params, x)

    # 1) Primary fused path (squeeze + excite in one pallas_call).
    fwd = jax.jit(squeeze_block_forward)
    out = jax.block_until_ready(fwd(params, x))
    assert out.shape == (N, C, H, W), out.shape
    assert bool(jnp.all(jnp.isfinite(out)))
    err = float(jnp.max(jnp.abs(out - ref)))
    assert err < 2e-2, f"fused path max abs err {err}"

    # 2) Large-feature-map fallback path (tiled pooling kernel + re-scale
    #    kernel), forced onto the small test shape so it is exercised too.
    s = squeeze_gate(x, params["w1"], params["b1"], params["w2"], params["b2"],
                     hw_tile_max=128)   # forces a multi-tile HW reduction
    out2 = jax.block_until_ready(excite(x, s))
    err2 = float(jnp.max(jnp.abs(out2 - ref)))
    assert err2 < 2e-2, f"fallback path max abs err {err2}"

    print("KERNEL_OK")
</pallas_src>

<mosaic_0001>
module attributes {stable_mosaic.version = 11 : i64} {
  func.func @_fused_kernel(%arg0: i32, %arg1: memref<1x64x256xf32, #tpu.memory_space<vmem>>, %arg2: memref<64x16xf32, #tpu.memory_space<vmem>>, %arg3: memref<1x16xf32, #tpu.memory_space<vmem>>, %arg4: memref<16x64xf32, #tpu.memory_space<vmem>>, %arg5: memref<1x64xf32, #tpu.memory_space<vmem>>, %arg6: memref<1x64x256xf32, #tpu.memory_space<vmem>>) attributes {dimension_semantics = [#tpu.dimension_semantics<parallel>], iteration_bounds = array<i64: 2>, scalar_prefetch = 0 : i64, scratch_operands = 0 : i64, tpu.core_type = #tpu.core_type<tc>, window_params = [{transform_indices = @transform_0, window_bounds = array<i64: 1, 64, 256>}, {pipeline_mode = #tpu.pipeline_mode<synchronous>, transform_indices = @transform_1, window_bounds = array<i64: 64, 16>}, {pipeline_mode = #tpu.pipeline_mode<synchronous>, transform_indices = @transform_2, window_bounds = array<i64: 1, 16>}, {pipeline_mode = #tpu.pipeline_mode<synchronous>, transform_indices = @transform_3, window_bounds = array<i64: 16, 64>}, {pipeline_mode = #tpu.pipeline_mode<synchronous>, transform_indices = @transform_4, window_bounds = array<i64: 1, 64>}, {transform_indices = @transform_5, window_bounds = array<i64: 1, 64, 256>}]} {
    %c0 = arith.constant 0 : index
    %c0_0 = arith.constant 0 : index
    %c0_1 = arith.constant 0 : index
    %0 = vector.load %arg1[%c0, %c0_0, %c0_1] : memref<1x64x256xf32, #tpu.memory_space<vmem>>, vector<1x64x256xf32>
    %cst = arith.constant dense<0.000000e+00> : vector<1x64xf32>
    %1 = vector.multi_reduction <add>, %0, %cst [2] : vector<1x64x256xf32> to vector<1x64xf32>
    %cst_2 = arith.constant 3.906250e-03 : f32
    %2 = vector.broadcast %cst_2 : f32 to vector<1x64xf32>
    %3 = arith.mulf %1, %2 : vector<1x64xf32>
    %c0_3 = arith.constant 0 : index
    %c0_4 = arith.constant 0 : index
    %4 = vector.load %arg2[%c0_3, %c0_4] : memref<64x16xf32, #tpu.memory_space<vmem>>, vector<64x16xf32>
    %cst_5 = arith.constant dense<0.000000e+00> : vector<1x16xf32>
    %5 = tpu.matmul %3, %4, %cst_5 {dimension_numbers = #tpu.dot_dimension_numbers<[1], [0], [0], [1], [0, 0, 1, 1], [], []>} : vector<1x64xf32>, vector<64x16xf32>, vector<1x16xf32> -> vector<1x16xf32>
    %c0_6 = arith.constant 0 : index
    %c0_7 = arith.constant 0 : index
    %6 = vector.load %arg3[%c0_6, %c0_7] : memref<1x16xf32, #tpu.memory_space<vmem>>, vector<1x16xf32>
    %7 = arith.addf %5, %6 : vector<1x16xf32>
    %cst_8 = arith.constant 0.000000e+00 : f32
    %8 = vector.broadcast %cst_8 : f32 to vector<1x16xf32>
    %9 = arith.maximumf %7, %8 : vector<1x16xf32>
    %c0_9 = arith.constant 0 : index
    %c0_10 = arith.constant 0 : index
    %10 = vector.load %arg4[%c0_9, %c0_10] : memref<16x64xf32, #tpu.memory_space<vmem>>, vector<16x64xf32>
    %cst_11 = arith.constant dense<0.000000e+00> : vector<1x64xf32>
    %11 = tpu.matmul %9, %10, %cst_11 {dimension_numbers = #tpu.dot_dimension_numbers<[1], [0], [0], [1], [0, 0, 1, 1], [], []>} : vector<1x16xf32>, vector<16x64xf32>, vector<1x64xf32> -> vector<1x64xf32>
    %c0_12 = arith.constant 0 : index
    %c0_13 = arith.constant 0 : index
    %12 = vector.load %arg5[%c0_12, %c0_13] : memref<1x64xf32, #tpu.memory_space<vmem>>, vector<1x64xf32>
    %13 = arith.addf %11, %12 : vector<1x64xf32>
    %cst_14 = arith.constant 3.000000e+00 : f32
    %14 = vector.broadcast %cst_14 : f32 to vector<1x64xf32>
    %15 = arith.addf %13, %14 : vector<1x64xf32>
    %cst_15 = arith.constant 0.000000e+00 : f32
    %cst_16 = arith.constant 6.000000e+00 : f32
    %16 = vector.broadcast %cst_15 : f32 to vector<1x64xf32>
    %17 = arith.maximumf %16, %15 : vector<1x64xf32>
    %18 = vector.broadcast %cst_16 : f32 to vector<1x64xf32>
    %19 = arith.minimumf %18, %17 : vector<1x64xf32>
    %cst_17 = arith.constant 0.166666672 : f32
    %20 = vector.broadcast %cst_17 : f32 to vector<1x64xf32>
    %21 = arith.mulf %19, %20 : vector<1x64xf32>
    %22 = vector.shape_cast %21 : vector<1x64xf32> to vector<1x64x1xf32>
    %23 = vector.broadcast %22 : vector<1x64x1xf32> to vector<1x64x256xf32>
    %24 = arith.mulf %0, %23 : vector<1x64x256xf32>
    %c0_18 = arith.constant 0 : index
    %c0_19 = arith.constant 0 : index
    %c0_20 = arith.constant 0 : index
    %25 = vector.load %arg6[%c0_18, %c0_19, %c0_20] : memref<1x64x256xf32, #tpu.memory_space<vmem>>, vector<1x64x256xf32>
    tpu.vector_store %arg6[%c0_18, %c0_19, %c0_20], %24 {strides = array<i32>} : memref<1x64x256xf32, #tpu.memory_space<vmem>>, vector<1x64x256xf32>,
    return
  }
  func.func @transform_0(%arg0: i32) -> (i32, i32, i32) {
    %c0_i32 = arith.constant 0 : i32
    %c0_i32_0 = arith.constant 0 : i32
    %c0_i32_1 = arith.constant 0 : i32
    return %arg0, %c0_i32, %c0_i32_0 : i32, i32, i32
  }
  func.func @transform_1(%arg0: i32) -> (i32, i32) {
    %c0_i32 = arith.constant 0 : i32
    %c0_i32_0 = arith.constant 0 : i32
    %c0_i32_1 = arith.constant 0 : i32
    return %c0_i32, %c0_i32_0 : i32, i32
  }
  func.func @transform_2(%arg0: i32) -> (i32, i32) {
    %c0_i32 = arith.constant 0 : i32
    %c0_i32_0 = arith.constant 0 : i32
    %c0_i32_1 = arith.constant 0 : i32
    return %c0_i32, %c0_i32_0 : i32, i32
  }
  func.func @transform_3(%arg0: i32) -> (i32, i32) {
    %c0_i32 = arith.constant 0 : i32
    %c0_i32_0 = arith.constant 0 : i32
    %c0_i32_1 = arith.constant 0 : i32
    return %c0_i32, %c0_i32_0 : i32, i32
  }
  func.func @transform_4(%arg0: i32) -> (i32, i32) {
    %c0_i32 = arith.constant 0 : i32
    %c0_i32_0 = arith.constant 0 : i32
    %c0_i32_1 = arith.constant 0 : i32
    return %c0_i32, %c0_i32_0 : i32, i32
  }
  func.func @transform_5(%arg0: i32) -> (i32, i32, i32) {
    %c0_i32 = arith.constant 0 : i32
    %c0_i32_0 = arith.constant 0 : i32
    %c0_i32_1 = arith.constant 0 : i32
    return %arg0, %c0_i32, %c0_i32_0 : i32, i32, i32
  }
}

</mosaic_0001>

<llo_original>
// kernel: squeeze_block_forward.1
$region0: #{squeeze_block_forward.1}
  #allocation0 [shape = 'u32[]', space=smem, size = 0x4, offset = 0x4, fixed_abs, tag = 'smem constant byte address 0x4 - core index']
  #allocation1 [shape = 'u32[144,128]{1,0:T(1,128)}', space=vmem, size = 0x12000, scoped, tag = 'internal scratch']
  %s0 = inlined_call_operand.vmem [shape: f32[2,64,256], index: 0, kind: input, shape index: {}]
  %s1 = inlined_call_operand.vmem [shape: f32[64,16], index: 1, kind: input, shape index: {}]
  %s2 = inlined_call_operand.vmem [shape: f32[1,16], index: 2, kind: input, shape index: {}]
  %s3 = inlined_call_operand.vmem [shape: f32[16,64], index: 3, kind: input, shape index: {}]
  %s4 = inlined_call_operand.vmem [shape: f32[1,64], index: 4, kind: input, shape index: {}]
  %s5 = inlined_call_operand.vmem [shape: f32[2,64,256], index: 5, kind: output, shape index: {}]
  %s6 = sld [smem:[#allocation0]]
  $region53: #{squeeze_block_forward.1} parent=0
    _
  %s8 = ssub.s32 1, %s6
  %s9 = scalar_select 0, %s8, %s6
  loop: start=0, step=1, limit=4
  $region2: #{squeeze_block_forward.1} parent=0 // loop_pre_header
    _
  $region3: #{squeeze_block_forward.1} parent=0 // loop_header
    %s11 = sphi 0, %s15
    %p12 = scmp.ge.s32.totalorder %s11, 4
    %s21 = sphi 0, %s23
    %s24 = sphi 0, %s21
    %s25 = sphi 0, %s24
    %s41 = sphi 0, %s25
    %s45 = sphi 0, %s45
    %s47 = sphi 0, %s45
    %s48 = sphi 0, %s47
    %s62 = sphi 0, %s48
    %s66 = sphi 0, %s66
    %s68 = sphi 0, %s66
    %s69 = sphi 0, %s68
    %s83 = sphi 0, %s69
    %s87 = sphi 0, %s87
    %s89 = sphi 0, %s87
    %s90 = sphi 0, %s89
    %s104 = sphi 0, %s90
    %s108 = sphi 0, %s108
    %s110 = sphi 0, %s108
    %s111 = sphi 0, %s110
    %s125 = sphi 0, %s111
    %s131 = sphi 0, %s133
    %s134 = sphi 0, %s131
    %s135 = sphi 0, %s134
    %s151 = sphi 0, %s135
  $region4: #{squeeze_block_forward.1} parent=0 // loop_header_branch
    %14 = sbr.rel (%p12) target = $region8
  $region5: #{squeeze_block_forward.1} parent=0 // loop_body
    %s16 = ssub.s32 %s11, 1
    %s17 = ssub.s32 %s11, 2
    %s18 = sadd.s32 %s11, 1
    %s19 = ssub.s32 %s11, %s18
    %p20 = scmp.eq.s32.totalorder %s19, 0
    %s22 = sadd.s32 %s21, 1
    %s23 = scalar_select %p20, %s21, %s22
    %p26 = pneg %p20
    %p27 = scmp.eq.s32.totalorder %s11, 1
    %p28 = por %p26, %p27
    %p29 = scmp.ne.s32.totalorder %s21, %s24
    %p30 = scmp.eq.s32.totalorder %s11, 0
    %p31 = por %p29, %p30
    %p32 = scmp.ne.s32.totalorder %s21, %s24
    %p33 = scmp.eq.s32.totalorder %s16, 1
    %p34 = por %p32, %p33
    %p35 = scmp.ne.s32.totalorder %s24, %s25
    %p36 = scmp.eq.s32.totalorder %s16, 0
    %p37 = por %p35, %p36
    %p38 = scmp.ne.s32.totalorder %s24, %s25
    %p39 = scmp.eq.s32.totalorder %s17, 1
    %p40 = por %p38, %p39
    %p42 = scmp.ne.s32.totalorder %s25, %s41
    %p43 = scmp.eq.s32.totalorder %s17, 0
    %p44 = por %p42, %p43
    %s46 = sadd.s32 %s45, 1
    %p49 = scmp.eq.s32.totalorder %s11, 1
    %p50 = scmp.ne.s32.totalorder %s45, %s47
    %p51 = scmp.eq.s32.totalorder %s11, 0
    %p52 = por %p50, %p51
    %p53 = scmp.ne.s32.totalorder %s45, %s47
    %p54 = scmp.eq.s32.totalorder %s16, 1
    %p55 = por %p53, %p54
    %p56 = scmp.ne.s32.totalorder %s47, %s48
    %p57 = scmp.eq.s32.totalorder %s16, 0
    %p58 = por %p56, %p57
    %p59 = scmp.ne.s32.totalorder %s47, %s48
    %p60 = scmp.eq.s32.totalorder %s17, 1
    %p61 = por %p59, %p60
    %p63 = scmp.ne.s32.totalorder %s48, %s62
    %p64 = scmp.eq.s32.totalorder %s17, 0
    %p65 = por %p63, %p64
    %s67 = sadd.s32 %s66, 1
    %p70 = scmp.eq.s32.totalorder %s11, 1
    %p71 = scmp.ne.s32.totalorder %s66, %s68
    %p72 = scmp.eq.s32.totalorder %s11, 0
    %p73 = por %p71, %p72
    %p74 = scmp.ne.s32.totalorder %s66, %s68
    %p75 = scmp.eq.s32.totalorder %s16, 1
    %p76 = por %p74, %p75
    %p77 = scmp.ne.s32.totalorder %s68, %s69
    %p78 = scmp.eq.s32.totalorder %s16, 0
    %p79 = por %p77, %p78
    %p80 = scmp.ne.s32.totalorder %s68, %s69
    %p81 = scmp.eq.s32.totalorder %s17, 1
    %p82 = por %p80, %p81
    %p84 = scmp.ne.s32.totalorder %s69, %s83
    %p85 = scmp.eq.s32.totalorder %s17, 0
    %p86 = por %p84, %p85
    %s88 = sadd.s32 %s87, 1
    %p91 = scmp.eq.s32.totalorder %s11, 1
    %p92 = scmp.ne.s32.totalorder %s87, %s89
    %p93 = scmp.eq.s32.totalorder %s11, 0
    %p94 = por %p92, %p93
    %p95 = scmp.ne.s32.totalorder %s87, %s89
    %p96 = scmp.eq.s32.totalorder %s16, 1
    %p97 = por %p95, %p96
    %p98 = scmp.ne.s32.totalorder %s89, %s90
    %p99 = scmp.eq.s32.totalorder %s16, 0
    %p100 = por %p98, %p99
    %p101 = scmp.ne.s32.totalorder %s89, %s90
    %p102 = scmp.eq.s32.totalorder %s17, 1
    %p103 = por %p101, %p102
    %p105 = scmp.ne.s32.totalorder %s90, %s104
    %p106 = scmp.eq.s32.totalorder %s17, 0
    %p107 = por %p105, %p106
    %s109 = sadd.s32 %s108, 1
    %p112 = scmp.eq.s32.totalorder %s11, 1
    %p113 = scmp.ne.s32.totalorder %s108, %s110
    %p114 = scmp.eq.s32.totalorder %s11, 0
    %p115 = por %p113, %p114
    %p116 = scmp.ne.s32.totalorder %s108, %s110
    %p117 = scmp.eq.s32.totalorder %s16, 1
    %p118 = por %p116, %p117
    %p119 = scmp.ne.s32.totalorder %s110, %s111
    %p120 = scmp.eq.s32.totalorder %s16, 0
    %p121 = por %p119, %p120
    %p122 = scmp.ne.s32.totalorder %s110, %s111
    %p123 = scmp.eq.s32.totalorder %s17, 1
    %p124 = por %p122, %p123
    %p126 = scmp.ne.s32.totalorder %s111, %s125
    %p127 = scmp.eq.s32.totalorder %s17, 0
    %p128 = por %p126, %p127
    %s129 = ssub.s32 %s11, %s18
    %p130 = scmp.eq.s32.totalorder %s129, 0
    %s132 = sadd.s32 %s131, 1
    %s133 = scalar_select %p130, %s131, %s132
    %p136 = pneg %p130
    %p137 = scmp.eq.s32.totalorder %s11, 1
    %p138 = por %p136, %p137
    %p139 = scmp.ne.s32.totalorder %s131, %s134
    %p140 = scmp.eq.s32.totalorder %s11, 0
    %p141 = por %p139, %p140
    %p142 = scmp.ne.s32.totalorder %s131, %s134
    %p143 = scmp.eq.s32.totalorder %s16, 1
    %p144 = por %p142, %p143
    %p145 = scmp.ne.s32.totalorder %s134, %s135
    %p146 = scmp.eq.s32.totalorder %s16, 0
    %p147 = por %p145, %p146
    %p148 = scmp.ne.s32.totalorder %s134, %s135
    %p149 = scmp.eq.s32.totalorder %s17, 1
    %p150 = por %p148, %p149
    %p152 = scmp.ne.s32.totalorder %s135, %s151
    %p153 = scmp.eq.s32.totalorder %s17, 0
    %p154 = por %p152, %p153
    %p155 = scmp.le.s32.totalorder 1, %s11
    %p156 = scmp.lt.s32.totalorder %s11, 3
    %p157 = pnand %p155, %p156
    %p158 = pneg %p157
    // Predicated region
    $region9: #{squeeze_block_forward.1} parent=5 // pred_check
      _
    $region10: #{squeeze_block_forward.1} parent=5 // pred_check_branch
      %160 = sbr.rel (%p157) target = $region12
    $region11: #{squeeze_block_forward.1} parent=5 // pred_region
      %s161 = ssub.s32 %s11, 1
      // Predicated region
      $region13: #{squeeze_block_forward.1} parent=11 // pred_check
        %p162 = pneg %p58
      $region14: #{squeeze_block_forward.1} parent=11 // pred_check_branch
        %164 = sbr.rel (%p162) target = $region16
      $region15: #{squeeze_block_forward.1} parent=11 // pred_region
        _
      $region16: #{squeeze_block_forward.1} parent=11 // pred_fallthru
        _
      // Predicated region
      $region17: #{squeeze_block_forward.1} parent=11 // pred_check
        %p165 = pneg %p79
      $region18: #{squeeze_block_forward.1} parent=11 // pred_check_branch
        %167 = sbr.rel (%p165) target = $region20
      $region19: #{squeeze_block_forward.1} parent=11 // pred_region
        _
      $region20: #{squeeze_block_forward.1} parent=11 // pred_fallthru
        _
      // Predicated region
      $region21: #{squeeze_block_forward.1} parent=11 // pred_check
        %p168 = pneg %p100
      $region22: #{squeeze_block_forward.1} parent=11 // pred_check_branch
        %170 = sbr.rel (%p168) target = $region24
      $region23: #{squeeze_block_forward.1} parent=11 // pred_region
        _
      $region24: #{squeeze_block_forward.1} parent=11 // pred_fallthru
        _
      // Predicated region
      $region25: #{squeeze_block_forward.1} parent=11 // pred_check
        %p171 = pneg %p121
      $region26: #{squeeze_block_forward.1} parent=11 // pred_check_branch
        %173 = sbr.rel (%p171) target = $region28
      $region27: #{squeeze_block_forward.1} parent=11 // pred_region
        _
      $region28: #{squeeze_block_forward.1} parent=11 // pred_fallthru
        _
    $region12: #{squeeze_block_forward.1} parent=5 // pred_fallthru
      _
    %p174 = scmp.lt.s32.totalorder %s11, 2
    // Predicated region
    $region29: #{squeeze_block_forward.1} parent=5 // pred_check
      %p175 = pneg %p174
    $region30: #{squeeze_block_forward.1} parent=5 // pred_check_branch
      %177 = sbr.rel (%p175) target = $region32
    $region31: #{squeeze_block_forward.1} parent=5 // pred_region
      // Predicated region
      $region33: #{squeeze_block_forward.1} parent=31 // pred_check
        %p178 = pneg %p31
      $region34: #{squeeze_block_forward.1} parent=31 // pred_check_branch
        %180 = sbr.rel (%p178) target = $region36
      $region35: #{squeeze_block_forward.1} parent=31 // pred_region
        %p181 = scmp.lt.s32.totalorder %s11, 1
        %s182 = scalar_select %p181, %s11, 1
        %s183 = smul.addr %s182, 16
        %s184 = smul.addr %s183, 8
        %s185 = scalar_lea.vmem %s0, %s184
      $region36: #{squeeze_block_forward.1} parent=31 // pred_fallthru
        _
    $region32: #{squeeze_block_forward.1} parent=5 // pred_fallthru
      _
    %p186 = scmp.le.s32.totalorder 1, %s11
    %p187 = scmp.lt.s32.totalorder %s11, 3
    %p188 = pnand %p186, %p187
    %p189 = pneg %p188
    // Predicated region
    $region37: #{squeeze_block_forward.1} parent=5 // pred_check
      _
    $region38: #{squeeze_block_forward.1} parent=5 // pred_check_branch
      %191 = sbr.rel (%p188) target = $region40
    $region39: #{squeeze_block_forward.1} parent=5 // pred_region
      %s192 = ssub.s32 %s11, 1
      %p193 = scmp.lt.s32.totalorder %s16, 1
      %s194 = scalar_select %p193, %s16, 1
      %s195 = smul.addr %s194, 16
      %s196 = smul.addr %s195, 8
      %s197 = scalar_lea.vmem %s0, %s196
      %p198 = pneg %p37
      %p199 = pneg %p34
      %p200 = pneg %p58
      %p201 = pneg %p55
      %p202 = pneg %p79
      %p203 = pneg %p76
      %p204 = pneg %p100
      %p205 = pneg %p97
      %p206 = pneg %p121
      %p207 = pneg %p118
      %p208 = pneg %p147
      %p209 = pneg %p144
      %p210 = scmp.lt.s32.totalorder %s16, 1
      %s211 = scalar_select %p210, %s16, 1
      %s212 = smul.addr %s211, 16
      %s213 = smul.addr %s212, 8
      %s214 = scalar_lea.vmem %s5, %s213
      %p215 = scmp.lt.s32.totalorder %s16, 1
      %s216 = scalar_select %p215, %s16, 1
      %s217 = smul.addr %s216, 16
      %s218 = smul.addr %s217, 8
      %s219 = scalar_lea.vmem %s0, %s218
      %p220 = scmp.lt.s32.totalorder %s16, 1
      %s221 = scalar_select %p220, %s16, 1
      %s222 = smul.addr %s221, 16
      %s223 = smul.addr %s222, 8
      %s224 = scalar_lea.vmem %s5, %s223
      %v225 = vld [vmem:[%s219] sm:$0xff]
      %v226 = vld [vmem:[%s219 + $0x8] sm:$0xff]
      %v227 = vld [vmem:[%s219 + $0x10] sm:$0xff]
      %v228 = vld [vmem:[%s219 + $0x18] sm:$0xff]
      %v229 = vld [vmem:[%s219 + $0x20] sm:$0xff]
      %v230 = vld [vmem:[%s219 + $0x28] sm:$0xff]
      %v231 = vld [vmem:[%s219 + $0x30] sm:$0xff]
      %v232 = vld [vmem:[%s219 + $0x38] sm:$0xff]
      %v233 = vld [vmem:[%s219 + $0x40] sm:$0xff]
      %v234 = vld [vmem:[%s219 + $0x48] sm:$0xff]
      %v235 = vld [vmem:[%s219 + $0x50] sm:$0xff]
      %v236 = vld [vmem:[%s219 + $0x58] sm:$0xff]
      %v237 = vld [vmem:[%s219 + $0x60] sm:$0xff]
      %v238 = vld [vmem:[%s219 + $0x68] sm:$0xff]
      %v239 = vld [vmem:[%s219 + $0x70] sm:$0xff]
      %v240 = vld [vmem:[%s219 + $0x78] sm:$0xff]
      %v241 = vadd.f32 %v225, %v226
      %242 = vadd.xlane.f32.xlu0 %v241
      %v243 = vpop.xlane.xlu0 %242
      %v244 = vadd.f32 %v227, %v228
      %245 = vadd.xlane.f32.xlu0 %v244
      %v246 = vpop.xlane.xlu0 %245
      %v247 = vadd.f32 %v229, %v230
      %248 = vadd.xlane.f32.xlu0 %v247
      %v249 = vpop.xlane.xlu0 %248
      %v250 = vadd.f32 %v231, %v232
      %251 = vadd.xlane.f32.xlu0 %v250
      %v252 = vpop.xlane.xlu0 %251
      %v253 = vadd.f32 %v233, %v234
      %254 = vadd.xlane.f32.xlu0 %v253
      %v255 = vpop.xlane.xlu0 %254
      %v256 = vadd.f32 %v235, %v236
      %257 = vadd.xlane.f32.xlu0 %v256
      %v258 = vpop.xlane.xlu0 %257
      %v259 = vadd.f32 %v237, %v238
      %260 = vadd.xlane.f32.xlu0 %v259
      %v261 = vpop.xlane.xlu0 %260
      %v262 = vadd.f32 %v239, %v240
      %263 = vadd.xlane.f32.xlu0 %v262
      %v264 = vpop.xlane.xlu0 %263
      %v265 = vmul.f32 %v243, 0.00390625
      %v266 = vmul.f32 %v246, 0.00390625
      %v267 = vmul.f32 %v249, 0.00390625
      %v268 = vmul.f32 %v252, 0.00390625
      %v269 = vmul.f32 %v255, 0.00390625
      %v270 = vmul.f32 %v258, 0.00390625
      %v271 = vmul.f32 %v261, 0.00390625
      %v272 = vmul.f32 %v264, 0.00390625
      %v273 = vld [vmem:[%s1] sm:$0xff]
      %v274 = vld [vmem:[%s1 + $0x8] sm:$0xff]
      %v275 = vld [vmem:[%s1 + $0x10] sm:$0xff]
      %v276 = vld [vmem:[%s1 + $0x18] sm:$0xff]
      %v277 = vld [vmem:[%s1 + $0x20] sm:$0xff]
      %v278 = vld [vmem:[%s1 + $0x28] sm:$0xff]
      %v279 = vld [vmem:[%s1 + $0x30] sm:$0xff]
      %v280 = vld [vmem:[%s1 + $0x38] sm:$0xff]
      %v281 = vld [vmem:[%s2] sm:$0x1]
      %v290 = vlaneseq
      %v291 = vand.u32 %v290, 127
      %v292 = vlaneseq
      %v293 = vshrl.u32 %v292, 7
      %v294 = vsub.s32 %v291, %v293
      %v295 = vrot.slane %v265, %v294
      %v296 = vadd.s32 %v291, 4294967288
      %v297 = vlaneseq
      %v298 = vshrl.u32 %v297, 7
      %v299 = vsub.s32 %v296, %v298
      %v300 = vrot.slane %v266, %v299
      %vm301 = vcmask 130112
      %v302 = vsel %vm301, %v300, %v295
      %v303 = vadd.s32 %v291, 4294967280
      %v304 = vlaneseq
      %v305 = vshrl.u32 %v304, 7
      %v306 = vsub.s32 %v303, %v305
      %v307 = vrot.slane %v267, %v306
      %vm308 = vcmask 195712
      %v309 = vsel %vm308, %v307, %v302
      %v310 = vadd.s32 %v291, 4294967272
      %v311 = vlaneseq
      %v312 = vshrl.u32 %v311, 7
      %v313 = vsub.s32 %v310, %v312
      %v314 = vrot.slane %v268, %v313
      %vm315 = vcmask 261312
      %v316 = vsel %vm315, %v314, %v309
      %v317 = vadd.s32 %v291, 4294967264
      %v318 = vlaneseq
      %v319 = vshrl.u32 %v318, 7
      %v320 = vsub.s32 %v317, %v319
      %v321 = vrot.slane %v269, %v320
      %vm322 = vcmask 326912
      %v323 = vsel %vm322, %v321, %v316
      %v324 = vadd.s32 %v291, 4294967256
      %v325 = vlaneseq
      %v326 = vshrl.u32 %v325, 7
      %v327 = vsub.s32 %v324, %v326
      %v328 = vrot.slane %v270, %v327
      %vm329 = vcmask 392512
      %v330 = vsel %vm329, %v328, %v323
      %v331 = vadd.s32 %v291, 4294967248
      %v332 = vlaneseq
      %v333 = vshrl.u32 %v332, 7
      %v334 = vsub.s32 %v331, %v333
      %v335 = vrot.slane %v271, %v334
      %vm336 = vcmask 458112
      %v337 = vsel %vm336, %v335, %v330
      %v338 = vadd.s32 %v291, 4294967240
      %v339 = vlaneseq
      %v340 = vshrl.u32 %v339, 7
      %v341 = vsub.s32 %v338, %v340
      %v342 = vrot.slane %v272, %v341
      %vm343 = vcmask 523712
      %v344 = vsel %vm343, %v342, %v337
      %vm345 = vcmask 523264
      %v346 = vsel %vm345, %v344, 0
      %348 = vmatprep.subr.mxu0 0.0
      %349 = vmatpush1.msra.mxu0 %v273
      %350 = vmatprep.subr.mxu0 0.0
      %351 = vmatpush1.msra.mxu0 %v274
      %352 = vmatprep.subr.mxu0 0.0
      %353 = vmatpush1.msra.mxu0 %v275
      %354 = vmatprep.subr.mxu0 0.0
      %355 = vmatpush1.msra.mxu0 %v276
      %356 = vmatprep.subr.mxu0 0.0
      %357 = vmatpush1.msra.mxu0 %v277
      %358 = vmatprep.subr.mxu0 0.0
      %359 = vmatpush1.msra.mxu0 %v278
      %360 = vmatprep.subr.mxu0 0.0
      %361 = vmatpush1.msra.mxu0 %v279
      %362 = vmatprep.subr.mxu0 0.0
      %363 = vmatpush1.msra.mxu0 %v280
      %364 = vmatprep.subr.mxu0 0.0
      %365 = vmatpush1.msra.mxu0 0.0
      %366 = vmatprep.subr.mxu0 0.0
      %367 = vmatpush1.msra.mxu0 0.0
      %368 = vmatprep.subr.mxu0 0.0
      %369 = vmatpush1.msra.mxu0 0.0
      %370 = vmatprep.subr.mxu0 0.0
      %371 = vmatpush1.msra.mxu0 0.0
      %372 = vmatprep.subr.mxu0 0.0
      %373 = vmatpush1.msra.mxu0 0.0
      %374 = vmatprep.subr.mxu0 0.0
      %375 = vmatpush1.msra.mxu0 0.0
      %376 = vmatprep.subr.mxu0 0.0
      %377 = vmatpush1.msra.mxu0 0.0
      %378 = vmatprep.subr.mxu0 0.0
      %379 = vmatpush1.msra.mxu0 0.0
      %380 = vmatprep.subr.mxu0 0.0
      %381 = vmatpush1.msra.mxu0 0.0
      %382 = vmatprep.subr.mxu0 0.0
      %383 = vmatpush1.msra.mxu0 0.0
      %384 = vmatprep.subr.mxu0 0.0
      %385 = vmatpush1.msra.mxu0 0.0
      %386 = vmatprep.subr.mxu0 0.0
      %387 = vmatpush1.msra.mxu0 0.0
      %388 = vmatprep.subr.mxu0 0.0
      %389 = vmatpush1.msra.mxu0 0.0
      %390 = vmatprep.subr.mxu0 0.0
      %391 = vmatpush1.msra.mxu0 0.0
      %392 = vmatprep.subr.mxu0 0.0
      %393 = vmatpush1.msra.mxu0 0.0
      %394 = vmatprep.subr.mxu0 0.0
      %395 = vmatpush1.msra.mxu0 0.0
      %396 = vmatprep.subr.mxu0 0.0
      %397 = vmatpush1.msra.mxu0 0.0
      %398 = vmatprep.subr.mxu0 0.0
      %399 = vmatpush1.msra.mxu0 0.0
      %400 = vmatprep.subr.mxu0 0.0
      %401 = vmatpush1.msra.mxu0 0.0
      %402 = vmatprep.subr.mxu0 0.0
      %403 = vmatpush1.msra.mxu0 0.0
      %404 = vmatprep.subr.mxu0 0.0
      %405 = vmatpush1.msra.mxu0 0.0
      %406 = vmatprep.subr.mxu0 0.0
      %407 = vmatpush1.msra.mxu0 0.0
      %408 = vmatprep.subr.mxu0 0.0
      %409 = vmatpush1.msra.mxu0 0.0
      %410 = vmatprep.subr.mxu0 0.0
      %411 = vmatpush1.msra.mxu0 0.0
      %412 = vmatprep.mubr.f32.mxu0 0.0
      %413 = vmatmul.mubr.f32.gmra.mrb[0].mxu0 %v346
      %v414 = vpop.f32.mrb[0].mxu0
      %v415 = vadd.f32 %v281, %v414
      %v416 = vpop.f32.mrb[0].mxu0
      %417 = vdwg.mxu0
      %v418 = vmax.f32 %v415, 0.0
      %v419 = vld [vmem:[%s3] sm:$0xff]
      %v420 = vld [vmem:[%s3 + $0x8] sm:$0xff]
      %v421 = vld [vmem:[%s4] sm:$0x1]
      %vm422 = vcmask 130048
      %v424 = vsel %vm422, %v418, 0
      %426 = vmatprep.subr.mxu0 0.0
      %427 = vmatpush1.msra.mxu0 %v419
      %428 = vmatprep.subr.mxu0 0.0
      %429 = vmatpush1.msra.mxu0 %v420
      %430 = vmatprep.subr.mxu0 0.0
      %431 = vmatpush1.msra.mxu0 0.0
      %432 = vmatprep.subr.mxu0 0.0
      %433 = vmatpush1.msra.mxu0 0.0
      %434 = vmatprep.subr.mxu0 0.0
      %435 = vmatpush1.msra.mxu0 0.0
      %436 = vmatprep.subr.mxu0 0.0
      %437 = vmatpush1.msra.mxu0 0.0
      %438 = vmatprep.subr.mxu0 0.0
      %439 = vmatpush1.msra.mxu0 0.0
      %440 = vmatprep.subr.mxu0 0.0
      %441 = vmatpush1.msra.mxu0 0.0
      %442 = vmatprep.subr.mxu0 0.0
      %443 = vmatpush1.msra.mxu0 0.0
      %444 = vmatprep.subr.mxu0 0.0
      %445 = vmatpush1.msra.mxu0 0.0
      %446 = vmatprep.subr.mxu0 0.0
      %447 = vmatpush1.msra.mxu0 0.0
      %448 = vmatprep.subr.mxu0 0.0
      %449 = vmatpush1.msra.mxu0 0.0
      %450 = vmatprep.subr.mxu0 0.0
      %451 = vmatpush1.msra.mxu0 0.0
      %452 = vmatprep.subr.mxu0 0.0
      %453 = vmatpush1.msra.mxu0 0.0
      %454 = vmatprep.subr.mxu0 0.0
      %455 = vmatpush1.msra.mxu0 0.0
      %456 = vmatprep.subr.mxu0 0.0
      %457 = vmatpush1.msra.mxu0 0.0
      %458 = vmatprep.subr.mxu0 0.0
      %459 = vmatpush1.msra.mxu0 0.0
      %460 = vmatprep.subr.mxu0 0.0
      %461 = vmatpush1.msra.mxu0 0.0
      %462 = vmatprep.subr.mxu0 0.0
      %463 = vmatpush1.msra.mxu0 0.0
      %464 = vmatprep.subr.mxu0 0.0
      %465 = vmatpush1.msra.mxu0 0.0
      %466 = vmatprep.subr.mxu0 0.0
      %467 = vmatpush1.msra.mxu0 0.0
      %468 = vmatprep.subr.mxu0 0.0
      %469 = vmatpush1.msra.mxu0 0.0
      %470 = vmatprep.subr.mxu0 0.0
      %471 = vmatpush1.msra.mxu0 0.0
      %472 = vmatprep.subr.mxu0 0.0
      %473 = vmatpush1.msra.mxu0 0.0
      %474 = vmatprep.subr.mxu0 0.0
      %475 = vmatpush1.msra.mxu0 0.0
      %476 = vmatprep.subr.mxu0 0.0
      %477 = vmatpush1.msra.mxu0 0.0
      %478 = vmatprep.subr.mxu0 0.0
      %479 = vmatpush1.msra.mxu0 0.0
      %480 = vmatprep.subr.mxu0 0.0
      %481 = vmatpush1.msra.mxu0 0.0
      %482 = vmatprep.subr.mxu0 0.0
      %483 = vmatpush1.msra.mxu0 0.0
      %484 = vmatprep.subr.mxu0 0.0
      %485 = vmatpush1.msra.mxu0 0.0
      %486 = vmatprep.subr.mxu0 0.0
      %487 = vmatpush1.msra.mxu0 0.0
      %488 = vmatprep.subr.mxu0 0.0
      %489 = vmatpush1.msra.mxu0 0.0
      %490 = vmatprep.mubr.f32.mxu0 0.0
      %491 = vmatmul.mubr.f32.gmra.mrb[0].mxu0 %v424
      %v492 = vpop.f32.mrb[0].mxu0
      %v493 = vadd.f32 %v421, %v492
      %v494 = vpop.f32.mrb[0].mxu0
      %495 = vdwg.mxu0
      %v496 = vadd.f32 %v493, 3.0
      %v497 = vmax.f32 %v496, 0.0
      %v498 = vmin.f32 %v497, 6.0
      %v499 = vmul.f32 %v498, 0.16666667
      %v500 = vlaneseq
      %v501 = vshrl.u32 %v500, 7
      %v502 = vsub.s32 0, %v501
      %v503 = vrot.slane %v499, %v502
      %505 = vbcast.lane.b32.xlu0 %v503, 256
      %v506 = vpop.permute.xlu0 %505
      %s508 = sor.u32 256, 8
      %509 = vbcast.lane.b32.xlu0 %v503, %s508
      %v510 = vpop.permute.xlu0 %509
      %s512 = sor.u32 256, 16
      %513 = vbcast.lane.b32.xlu0 %v503, %s512
      %v514 = vpop.permute.xlu0 %513
      %s516 = sor.u32 256, 24
      %517 = vbcast.lane.b32.xlu0 %v503, %s516
      %v518 = vpop.permute.xlu0 %517
      %s520 = sor.u32 256, 32
      %521 = vbcast.lane.b32.xlu0 %v503, %s520
      %v522 = vpop.permute.xlu0 %521
      %s524 = sor.u32 256, 40
      %525 = vbcast.lane.b32.xlu0 %v503, %s524
      %v526 = vpop.permute.xlu0 %525
      %s528 = sor.u32 256, 48
      %529 = vbcast.lane.b32.xlu0 %v503, %s528
      %v530 = vpop.permute.xlu0 %529
      %s532 = sor.u32 256, 56
      %533 = vbcast.lane.b32.xlu0 %v503, %s532
      %v534 = vpop.permute.xlu0 %533
      %v535 = vmul.f32 %v225, %v506
      %v536 = vmul.f32 %v226, %v506
      %v537 = vmul.f32 %v227, %v510
      %v538 = vmul.f32 %v228, %v510
      %v539 = vmul.f32 %v229, %v514
      %v540 = vmul.f32 %v230, %v514
      %v541 = vmul.f32 %v231, %v518
      %v542 = vmul.f32 %v232, %v518
      %v543 = vmul.f32 %v233, %v522
      %v544 = vmul.f32 %v234, %v522
      %v545 = vmul.f32 %v235, %v526
      %v546 = vmul.f32 %v236, %v526
      %v547 = vmul.f32 %v237, %v530
      %v548 = vmul.f32 %v238, %v530
      %v549 = vmul.f32 %v239, %v534
      %v550 = vmul.f32 %v240, %v534
      %551 = vst [vmem:[%s224] sm:$0xff] %v535
      %552 = vst [vmem:[%s224 + $0x8] sm:$0xff] %v536
      %553 = vst [vmem:[%s224 + $0x10] sm:$0xff] %v537
      %554 = vst [vmem:[%s224 + $0x18] sm:$0xff] %v538
      %555 = vst [vmem:[%s224 + $0x20] sm:$0xff] %v539
      %556 = vst [vmem:[%s224 + $0x28] sm:$0xff] %v540
      %557 = vst [vmem:[%s224 + $0x30] sm:$0xff] %v541
      %558 = vst [vmem:[%s224 + $0x38] sm:$0xff] %v542
      %559 = vst [vmem:[%s224 + $0x40] sm:$0xff] %v543
      %560 = vst [vmem:[%s224 + $0x48] sm:$0xff] %v544
      %561 = vst [vmem:[%s224 + $0x50] sm:$0xff] %v545
      %562 = vst [vmem:[%s224 + $0x58] sm:$0xff] %v546
      %563 = vst [vmem:[%s224 + $0x60] sm:$0xff] %v547
      %564 = vst [vmem:[%s224 + $0x68] sm:$0xff] %v548
      %565 = vst [vmem:[%s224 + $0x70] sm:$0xff] %v549
      %566 = vst [vmem:[%s224 + $0x78] sm:$0xff] %v550
      %p567 = scmp.lt.s32.totalorder %s16, 1
      %s568 = scalar_select %p567, %s16, 1
      %s569 = smul.addr %s568, 16
      %s570 = smul.addr %s569, 8
      %s571 = scalar_lea.vmem %s5, %s570
      // Predicated region
      $region41: #{squeeze_block_forward.1} parent=39 // pred_check
        %p572 = pneg %p144
      $region42: #{squeeze_block_forward.1} parent=39 // pred_check_branch
        %574 = sbr.rel (%p572) target = $region44
      $region43: #{squeeze_block_forward.1} parent=39 // pred_region
        _
      $region44: #{squeeze_block_forward.1} parent=39 // pred_fallthru
        _
    $region40: #{squeeze_block_forward.1} parent=5 // pred_fallthru
      _
    %p575 = scmp.le.s32.totalorder 2, %s11
    // Predicated region
    $region45: #{squeeze_block_forward.1} parent=5 // pred_check
      %p576 = pneg %p575
    $region46: #{squeeze_block_forward.1} parent=5 // pred_check_branch
      %578 = sbr.rel (%p576) target = $region48
    $region47: #{squeeze_block_forward.1} parent=5 // pred_region
      %s579 = ssub.s32 %s11, 2
      // Predicated region
      $region49: #{squeeze_block_forward.1} parent=47 // pred_check
        %p580 = pneg %p150
      $region50: #{squeeze_block_forward.1} parent=47 // pred_check_branch
        %582 = sbr.rel (%p580) target = $region52
      $region51: #{squeeze_block_forward.1} parent=47 // pred_region
        %p583 = scmp.lt.s32.totalorder %s17, 1
        %s584 = scalar_select %p583, %s17, 1
        %s585 = smul.addr %s584, 16
        %s586 = smul.addr %s585, 8
        %s587 = scalar_lea.vmem %s5, %s586
      $region52: #{squeeze_block_forward.1} parent=47 // pred_fallthru
        _
    $region48: #{squeeze_block_forward.1} parent=5 // pred_fallthru
      _
  $region6: #{squeeze_block_forward.1} parent=0 // loop_footer
    %s15 = sadd.s32 1, %s11
  $region7: #{squeeze_block_forward.1} parent=0 // loop_footer_branch
    %10 = sbr.rel target = $region3
  $region8: #{squeeze_block_forward.1} parent=0 // loop_exit
    _

</llo_original>
